<compile_context>
chip_gen: v7x
topology: tpu7x:2x2x1
jax: 0.10.0
libtpu: 0.0.40
codegen_flags: <defaults>
</compile_context>

<pallas_src>
import jax
import jax.numpy as jnp
from jax import lax
from jax.experimental import pallas as pl
from jax.experimental.pallas import tpu as pltpu

# ----- small config (mirrors NLICNN args) -----
B, S, E = 2, 16, 32                 # batch, seq len, embedding dim
VOCAB = 100
C_OUT = 8                           # args.out_channels  (args.in_channels = 1)
KERNEL_HEIGHTS = (3, 4, 5)          # args.kernel_heights (stride=1, padding=0)
KH_MAX = max(KERNEL_HEIGHTS)
NK = len(KERNEL_HEIGHTS)
TOTC = NK * C_OUT                   # 24 = concat of per-conv max-pooled features
NCLS = 2                            # n_classes
N_DOMAINS = 2
WIN = KH_MAX * E                    # 160 = im2col window width


def _vmem():
    return pl.BlockSpec(memory_space=pltpu.MemorySpace.VMEM)


# --------------------------- fused kernel ---------------------------

def mvcnn_kernel(win_e_ref, win_s_ref, vmask_ref, onehot_ref,
                 wce_ref, bce_ref, wfe_ref, bfe_ref,
                 wcs_ref, bcs_ref, wfs_ref, bfs_ref,
                 loss_ref, preds_ref):
    vmask = vmask_ref[...]           # (B*S, TOTC): 1.0 = valid conv position
    onehot = onehot_ref[...]         # (B, NCLS)
    row_id = lax.broadcasted_iota(jnp.int32, (B, TOTC), 0)

    def nlicnn(win, wc, bc, wf, bf):
        # all NK convs fused: (B*S, WIN) @ (WIN, TOTC) on the MXU
        act = jnp.maximum(
            jnp.dot(win, wc, preferred_element_type=jnp.float32) + bc, 0.0)
        # invalid time positions -> 0 (relu >= 0, so the max is unaffected)
        act = act * vmask
        # per-sequence max over time (tiny segmented reduce; no matmuls in loop)
        feat = jnp.zeros((B, TOTC), jnp.float32)
        for b in range(B):           # static, B=2
            mx = jnp.max(act[b * S:(b + 1) * S, :], axis=0, keepdims=True)
            feat = jnp.where(row_id == b, jnp.broadcast_to(mx, (B, TOTC)), feat)
        return jnp.dot(feat, wf, preferred_element_type=jnp.float32) + bf

    logits_e = nlicnn(win_e_ref[...], wce_ref[...], bce_ref[...],
                      wfe_ref[...], bfe_ref[...])      # domain expert
    logits_s = nlicnn(win_s_ref[...], wcs_ref[...], bcs_ref[...],
                      wfs_ref[...], bfs_ref[...])      # shared model

    # preds = softmax(expert logits); divide goes to the EUP (approx reciprocal)
    m_e = jnp.max(logits_e, axis=-1, keepdims=True)
    p_e = jnp.exp(logits_e - m_e)
    preds = p_e * pl.reciprocal(jnp.sum(p_e, axis=-1, keepdims=True), approx=True)

    # loss = CE(expert) + CE(shared)   (NLLLoss(log softmax) == cross-entropy)
    def nll(logits):
        m = jnp.max(logits, axis=-1, keepdims=True)
        lse = jnp.log(jnp.sum(jnp.exp(logits - m), axis=-1, keepdims=True)) + m
        return lse - jnp.sum(onehot * logits, axis=-1, keepdims=True)       # (B, 1)

    loss = jnp.mean(nll(logits_e) + nll(logits_s), axis=0, keepdims=True)   # (1, 1)

    # lane-dense (8, 128) outputs
    loss_ref[...] = jnp.broadcast_to(loss, (8, 128))
    preds_ref[...] = jnp.zeros((8, 128), jnp.float32)
    preds_ref[0:B, :] = jnp.concatenate(
        [preds, jnp.zeros((B, 128 - NCLS), jnp.float32)], axis=1)


# --------------------------- wrapper glue ---------------------------

def _flatten_conv_params(conv_ws, conv_bs):
    """Stack the per-kernel-height Conv2d weights into a single (KH_MAX*E, TOTC)
    matmul operand (rows beyond a conv's kernel height are zero)."""
    cols = []
    for kh, w in zip(KERNEL_HEIGHTS, conv_ws):          # w: (C_OUT, kh, E)
        flat = jnp.transpose(w, (1, 2, 0)).reshape(kh * E, C_OUT)
        flat = jnp.concatenate(
            [flat, jnp.zeros(((KH_MAX - kh) * E, C_OUT), jnp.float32)], axis=0)
        cols.append(flat)
    w_all = jnp.concatenate(cols, axis=1)               # (KH_MAX*E, TOTC)
    b_all = jnp.concatenate(conv_bs, axis=0).reshape(1, TOTC)
    return w_all, b_all


def _valid_mask():
    """(B*S, TOTC) mask: position t is a valid output of conv k iff t <= S - kh_k."""
    t = jnp.arange(B * S, dtype=jnp.int32) % S
    kh_per_col = jnp.repeat(jnp.asarray(KERNEL_HEIGHTS, jnp.int32), C_OUT)
    return (t[:, None] <= (S - kh_per_col)[None, :]).astype(jnp.float32)


def _im2col(x):
    """(B, S, E) masked embeddings -> (B*S, KH_MAX*E) conv windows (zero padded)."""
    xp = jnp.concatenate([x, jnp.zeros((B, KH_MAX - 1, E), jnp.float32)], axis=1)
    win = jnp.concatenate([xp[:, o:o + S, :] for o in range(KH_MAX)], axis=-1)
    return win.reshape(B * S, KH_MAX * E)


def init_params(key):
    ks = iter(jax.random.split(key, 32))

    def nrm(shape, scale=0.1):
        return (scale * jax.random.normal(next(ks), shape)).astype(jnp.float32)

    def nlicnn_params():
        return dict(
            emb=nrm((VOCAB, E)),
            conv_w=[nrm((C_OUT, kh, E)) for kh in KERNEL_HEIGHTS],
            conv_b=[nrm((C_OUT,), 0.01) for _ in KERNEL_HEIGHTS],
            fc_w=nrm((NCLS, TOTC)),
            fc_b=jnp.zeros((NCLS,), jnp.float32),
        )

    # domain_experts = ModuleList([NLICNN]*n_domains) -> ONE shared expert param set
    return dict(expert=nlicnn_params(), shared=nlicnn_params())


def multiview_cnn_forward(params, input_ids, attention_mask, domains, labels):
    del domains  # all domain experts alias the same module -> result is domain-independent
    mask = attention_mask.astype(jnp.float32)[..., None]          # (B, S, 1)

    # embedding gather + mask + im2col = XLA glue; dropout = identity (inference)
    win_e = _im2col(params['expert']['emb'][input_ids] * mask)
    win_s = _im2col(params['shared']['emb'][input_ids] * mask)

    wce, bce = _flatten_conv_params(params['expert']['conv_w'], params['expert']['conv_b'])
    wcs, bcs = _flatten_conv_params(params['shared']['conv_w'], params['shared']['conv_b'])
    wfe, bfe = params['expert']['fc_w'].T, params['expert']['fc_b'].reshape(1, NCLS)
    wfs, bfs = params['shared']['fc_w'].T, params['shared']['fc_b'].reshape(1, NCLS)

    onehot = jax.nn.one_hot(labels, NCLS, dtype=jnp.float32)

    loss_slab, preds_slab = pl.pallas_call(
        mvcnn_kernel,
        out_shape=(jax.ShapeDtypeStruct((8, 128), jnp.float32),
                   jax.ShapeDtypeStruct((8, 128), jnp.float32)),
        in_specs=[_vmem()] * 12,
        out_specs=(_vmem(), _vmem()),
    )(win_e, win_s, _valid_mask(), onehot,
      wce, bce, wfe, bfe, wcs, bcs, wfs, bfs)

    loss = loss_slab[0, 0]
    preds = preds_slab[:B, :NCLS]
    return loss, preds                     # matches (loss, preds) = module(...)[:2]


if __name__ == "__main__":
    key = jax.random.PRNGKey(0)
    kp, kid, kl = jax.random.split(key, 3)
    params = init_params(kp)

    input_ids = jax.random.randint(kid, (B, S), 0, VOCAB, dtype=jnp.int32)
    attention_mask = jnp.concatenate(
        [jnp.ones((B, S - 3), jnp.int32), jnp.zeros((B, 3), jnp.int32)], axis=1)
    labels = jax.random.randint(kl, (B,), 0, NCLS, dtype=jnp.int32)
    domains = jnp.zeros((B,), jnp.int32)

    loss, preds = multiview_cnn_forward(params, input_ids, attention_mask, domains, labels)
    jax.block_until_ready((loss, preds))
    print("KERNEL_OK")
</pallas_src>

<mosaic_0001>
module attributes {stable_mosaic.version = 11 : i64} {
  func.func @mvcnn_kernel(%arg0: memref<32x160xf32, #tpu.memory_space<vmem>>, %arg1: memref<32x160xf32, #tpu.memory_space<vmem>>, %arg2: memref<32x24xf32, #tpu.memory_space<vmem>>, %arg3: memref<2x2xf32, #tpu.memory_space<vmem>>, %arg4: memref<160x24xf32, #tpu.memory_space<vmem>>, %arg5: memref<1x24xf32, #tpu.memory_space<vmem>>, %arg6: memref<24x2xf32, #tpu.memory_space<vmem>>, %arg7: memref<1x2xf32, #tpu.memory_space<vmem>>, %arg8: memref<160x24xf32, #tpu.memory_space<vmem>>, %arg9: memref<1x24xf32, #tpu.memory_space<vmem>>, %arg10: memref<24x2xf32, #tpu.memory_space<vmem>>, %arg11: memref<1x2xf32, #tpu.memory_space<vmem>>, %arg12: memref<8x128xf32, #tpu.memory_space<vmem>>, %arg13: memref<8x128xf32, #tpu.memory_space<vmem>>) attributes {dimension_semantics = [], scalar_prefetch = 0 : i64, scratch_operands = 0 : i64, tpu.core_type = #tpu.core_type<tc>} {
    %c0 = arith.constant 0 : index
    %c0_0 = arith.constant 0 : index
    %0 = vector.load %arg2[%c0, %c0_0] : memref<32x24xf32, #tpu.memory_space<vmem>>, vector<32x24xf32>
    %c0_1 = arith.constant 0 : index
    %c0_2 = arith.constant 0 : index
    %1 = vector.load %arg3[%c0_1, %c0_2] : memref<2x2xf32, #tpu.memory_space<vmem>>, vector<2x2xf32>
    %2 = tpu.iota {dimensions = array<i32: 0>} : vector<2x24xi32>
    %c0_3 = arith.constant 0 : index
    %c0_4 = arith.constant 0 : index
    %3 = vector.load %arg0[%c0_3, %c0_4] : memref<32x160xf32, #tpu.memory_space<vmem>>, vector<32x160xf32>
    %c0_5 = arith.constant 0 : index
    %c0_6 = arith.constant 0 : index
    %4 = vector.load %arg4[%c0_5, %c0_6] : memref<160x24xf32, #tpu.memory_space<vmem>>, vector<160x24xf32>
    %c0_7 = arith.constant 0 : index
    %c0_8 = arith.constant 0 : index
    %5 = vector.load %arg5[%c0_7, %c0_8] : memref<1x24xf32, #tpu.memory_space<vmem>>, vector<1x24xf32>
    %c0_9 = arith.constant 0 : index
    %c0_10 = arith.constant 0 : index
    %6 = vector.load %arg6[%c0_9, %c0_10] : memref<24x2xf32, #tpu.memory_space<vmem>>, vector<24x2xf32>
    %c0_11 = arith.constant 0 : index
    %c0_12 = arith.constant 0 : index
    %7 = vector.load %arg7[%c0_11, %c0_12] : memref<1x2xf32, #tpu.memory_space<vmem>>, vector<1x2xf32>
    %cst = arith.constant dense<0.000000e+00> : vector<32x24xf32>
    %8 = tpu.matmul %3, %4, %cst {dimension_numbers = #tpu.dot_dimension_numbers<[1], [0], [0], [1], [0, 0, 1, 1], [], []>} : vector<32x160xf32>, vector<160x24xf32>, vector<32x24xf32> -> vector<32x24xf32>
    %9 = vector.broadcast %5 : vector<1x24xf32> to vector<32x24xf32>
    %10 = arith.addf %8, %9 : vector<32x24xf32>
    %cst_13 = arith.constant 0.000000e+00 : f32
    %11 = vector.broadcast %cst_13 : f32 to vector<32x24xf32>
    %12 = arith.maximumf %10, %11 : vector<32x24xf32>
    %13 = arith.mulf %12, %0 : vector<32x24xf32>
    %cst_14 = arith.constant 0.000000e+00 : f32
    %14 = vector.broadcast %cst_14 : f32 to vector<2x24xf32>
    %15 = vector.extract_strided_slice %13 {offsets = [0, 0], sizes = [16, 24], strides = [1, 1]} : vector<32x24xf32> to vector<16x24xf32>
    %cst_15 = arith.constant dense<0xFF800000> : vector<24xf32>
    %16 = vector.multi_reduction <maximumf>, %15, %cst_15 [0] : vector<16x24xf32> to vector<24xf32>
    %17 = vector.shape_cast %16 : vector<24xf32> to vector<1x24xf32>
    %c0_i32 = arith.constant 0 : i32
    %18 = vector.broadcast %c0_i32 : i32 to vector<2x24xi32>
    %19 = arith.cmpi eq, %2, %18 : vector<2x24xi32>
    %20 = vector.shape_cast %17 : vector<1x24xf32> to vector<1x24xf32>
    %21 = vector.broadcast %20 : vector<1x24xf32> to vector<2x24xf32>
    %22 = arith.select %19, %21, %14 : vector<2x24xi1>, vector<2x24xf32>
    %23 = vector.extract_strided_slice %13 {offsets = [16, 0], sizes = [16, 24], strides = [1, 1]} : vector<32x24xf32> to vector<16x24xf32>
    %cst_16 = arith.constant dense<0xFF800000> : vector<24xf32>
    %24 = vector.multi_reduction <maximumf>, %23, %cst_16 [0] : vector<16x24xf32> to vector<24xf32>
    %25 = vector.shape_cast %24 : vector<24xf32> to vector<1x24xf32>
    %c1_i32 = arith.constant 1 : i32
    %26 = vector.broadcast %c1_i32 : i32 to vector<2x24xi32>
    %27 = arith.cmpi eq, %2, %26 : vector<2x24xi32>
    %28 = vector.shape_cast %25 : vector<1x24xf32> to vector<1x24xf32>
    %29 = vector.broadcast %28 : vector<1x24xf32> to vector<2x24xf32>
    %30 = arith.select %27, %29, %22 : vector<2x24xi1>, vector<2x24xf32>
    %cst_17 = arith.constant dense<0.000000e+00> : vector<2x2xf32>
    %31 = tpu.matmul %30, %6, %cst_17 {dimension_numbers = #tpu.dot_dimension_numbers<[1], [0], [0], [1], [0, 0, 1, 1], [], []>} : vector<2x24xf32>, vector<24x2xf32>, vector<2x2xf32> -> vector<2x2xf32>
    %32 = vector.broadcast %7 : vector<1x2xf32> to vector<2x2xf32>
    %33 = arith.addf %31, %32 : vector<2x2xf32>
    %c0_18 = arith.constant 0 : index
    %c0_19 = arith.constant 0 : index
    %34 = vector.load %arg1[%c0_18, %c0_19] : memref<32x160xf32, #tpu.memory_space<vmem>>, vector<32x160xf32>
    %c0_20 = arith.constant 0 : index
    %c0_21 = arith.constant 0 : index
    %35 = vector.load %arg8[%c0_20, %c0_21] : memref<160x24xf32, #tpu.memory_space<vmem>>, vector<160x24xf32>
    %c0_22 = arith.constant 0 : index
    %c0_23 = arith.constant 0 : index
    %36 = vector.load %arg9[%c0_22, %c0_23] : memref<1x24xf32, #tpu.memory_space<vmem>>, vector<1x24xf32>
    %c0_24 = arith.constant 0 : index
    %c0_25 = arith.constant 0 : index
    %37 = vector.load %arg10[%c0_24, %c0_25] : memref<24x2xf32, #tpu.memory_space<vmem>>, vector<24x2xf32>
    %c0_26 = arith.constant 0 : index
    %c0_27 = arith.constant 0 : index
    %38 = vector.load %arg11[%c0_26, %c0_27] : memref<1x2xf32, #tpu.memory_space<vmem>>, vector<1x2xf32>
    %cst_28 = arith.constant dense<0.000000e+00> : vector<32x24xf32>
    %39 = tpu.matmul %34, %35, %cst_28 {dimension_numbers = #tpu.dot_dimension_numbers<[1], [0], [0], [1], [0, 0, 1, 1], [], []>} : vector<32x160xf32>, vector<160x24xf32>, vector<32x24xf32> -> vector<32x24xf32>
    %40 = vector.broadcast %36 : vector<1x24xf32> to vector<32x24xf32>
    %41 = arith.addf %39, %40 : vector<32x24xf32>
    %cst_29 = arith.constant 0.000000e+00 : f32
    %42 = vector.broadcast %cst_29 : f32 to vector<32x24xf32>
    %43 = arith.maximumf %41, %42 : vector<32x24xf32>
    %44 = arith.mulf %43, %0 : vector<32x24xf32>
    %cst_30 = arith.constant 0.000000e+00 : f32
    %45 = vector.broadcast %cst_30 : f32 to vector<2x24xf32>
    %46 = vector.extract_strided_slice %44 {offsets = [0, 0], sizes = [16, 24], strides = [1, 1]} : vector<32x24xf32> to vector<16x24xf32>
    %cst_31 = arith.constant dense<0xFF800000> : vector<24xf32>
    %47 = vector.multi_reduction <maximumf>, %46, %cst_31 [0] : vector<16x24xf32> to vector<24xf32>
    %48 = vector.shape_cast %47 : vector<24xf32> to vector<1x24xf32>
    %c0_i32_32 = arith.constant 0 : i32
    %49 = vector.broadcast %c0_i32_32 : i32 to vector<2x24xi32>
    %50 = arith.cmpi eq, %2, %49 : vector<2x24xi32>
    %51 = vector.shape_cast %48 : vector<1x24xf32> to vector<1x24xf32>
    %52 = vector.broadcast %51 : vector<1x24xf32> to vector<2x24xf32>
    %53 = arith.select %50, %52, %45 : vector<2x24xi1>, vector<2x24xf32>
    %54 = vector.extract_strided_slice %44 {offsets = [16, 0], sizes = [16, 24], strides = [1, 1]} : vector<32x24xf32> to vector<16x24xf32>
    %cst_33 = arith.constant dense<0xFF800000> : vector<24xf32>
    %55 = vector.multi_reduction <maximumf>, %54, %cst_33 [0] : vector<16x24xf32> to vector<24xf32>
    %56 = vector.shape_cast %55 : vector<24xf32> to vector<1x24xf32>
    %c1_i32_34 = arith.constant 1 : i32
    %57 = vector.broadcast %c1_i32_34 : i32 to vector<2x24xi32>
    %58 = arith.cmpi eq, %2, %57 : vector<2x24xi32>
    %59 = vector.shape_cast %56 : vector<1x24xf32> to vector<1x24xf32>
    %60 = vector.broadcast %59 : vector<1x24xf32> to vector<2x24xf32>
    %61 = arith.select %58, %60, %53 : vector<2x24xi1>, vector<2x24xf32>
    %cst_35 = arith.constant dense<0.000000e+00> : vector<2x2xf32>
    %62 = tpu.matmul %61, %37, %cst_35 {dimension_numbers = #tpu.dot_dimension_numbers<[1], [0], [0], [1], [0, 0, 1, 1], [], []>} : vector<2x24xf32>, vector<24x2xf32>, vector<2x2xf32> -> vector<2x2xf32>
    %63 = vector.broadcast %38 : vector<1x2xf32> to vector<2x2xf32>
    %64 = arith.addf %62, %63 : vector<2x2xf32>
    %cst_36 = arith.constant dense<0xFF800000> : vector<2xf32>
    %65 = vector.multi_reduction <maximumf>, %33, %cst_36 [1] : vector<2x2xf32> to vector<2xf32>
    %66 = vector.shape_cast %65 : vector<2xf32> to vector<2x1xf32>
    %67 = vector.broadcast %66 : vector<2x1xf32> to vector<2x2xf32>
    %68 = arith.subf %33, %67 : vector<2x2xf32>
    %69 = math.exp %68 : vector<2x2xf32>
    %cst_37 = arith.constant dense<0.000000e+00> : vector<2xf32>
    %70 = vector.multi_reduction <add>, %69, %cst_37 [1] : vector<2x2xf32> to vector<2xf32>
    %71 = vector.shape_cast %70 : vector<2xf32> to vector<2x1xf32>
    %72 = tpu.reciprocal %71 {approx = true} : vector<2x1xf32> -> vector<2x1xf32>
    %73 = vector.broadcast %72 : vector<2x1xf32> to vector<2x2xf32>
    %74 = arith.mulf %69, %73 : vector<2x2xf32>
    %cst_38 = arith.constant dense<0xFF800000> : vector<2xf32>
    %75 = vector.multi_reduction <maximumf>, %33, %cst_38 [1] : vector<2x2xf32> to vector<2xf32>
    %76 = vector.shape_cast %75 : vector<2xf32> to vector<2x1xf32>
    %77 = vector.broadcast %76 : vector<2x1xf32> to vector<2x2xf32>
    %78 = arith.subf %33, %77 : vector<2x2xf32>
    %79 = math.exp %78 : vector<2x2xf32>
    %cst_39 = arith.constant dense<0.000000e+00> : vector<2xf32>
    %80 = vector.multi_reduction <add>, %79, %cst_39 [1] : vector<2x2xf32> to vector<2xf32>
    %81 = vector.shape_cast %80 : vector<2xf32> to vector<2x1xf32>
    %82 = math.log %81 : vector<2x1xf32>
    %83 = arith.addf %82, %76 : vector<2x1xf32>
    %84 = arith.mulf %1, %33 : vector<2x2xf32>
    %cst_40 = arith.constant dense<0.000000e+00> : vector<2xf32>
    %85 = vector.multi_reduction <add>, %84, %cst_40 [1] : vector<2x2xf32> to vector<2xf32>
    %86 = vector.shape_cast %85 : vector<2xf32> to vector<2x1xf32>
    %87 = arith.subf %83, %86 : vector<2x1xf32>
    %cst_41 = arith.constant dense<0xFF800000> : vector<2xf32>
    %88 = vector.multi_reduction <maximumf>, %64, %cst_41 [1] : vector<2x2xf32> to vector<2xf32>
    %89 = vector.shape_cast %88 : vector<2xf32> to vector<2x1xf32>
    %90 = vector.broadcast %89 : vector<2x1xf32> to vector<2x2xf32>
    %91 = arith.subf %64, %90 : vector<2x2xf32>
    %92 = math.exp %91 : vector<2x2xf32>
    %cst_42 = arith.constant dense<0.000000e+00> : vector<2xf32>
    %93 = vector.multi_reduction <add>, %92, %cst_42 [1] : vector<2x2xf32> to vector<2xf32>
    %94 = vector.shape_cast %93 : vector<2xf32> to vector<2x1xf32>
    %95 = math.log %94 : vector<2x1xf32>
    %96 = arith.addf %95, %89 : vector<2x1xf32>
    %97 = arith.mulf %1, %64 : vector<2x2xf32>
    %cst_43 = arith.constant dense<0.000000e+00> : vector<2xf32>
    %98 = vector.multi_reduction <add>, %97, %cst_43 [1] : vector<2x2xf32> to vector<2xf32>
    %99 = vector.shape_cast %98 : vector<2xf32> to vector<2x1xf32>
    %100 = arith.subf %96, %99 : vector<2x1xf32>
    %101 = arith.addf %87, %100 : vector<2x1xf32>
    %cst_44 = arith.constant dense<0.000000e+00> : vector<1xf32>
    %102 = vector.multi_reduction <add>, %101, %cst_44 [0] : vector<2x1xf32> to vector<1xf32>
    %103 = vector.shape_cast %102 : vector<1xf32> to vector<1x1xf32>
    %cst_45 = arith.constant 2.000000e+00 : f32
    %104 = vector.broadcast %cst_45 : f32 to vector<1x1xf32>
    %105 = arith.divf %103, %104 : vector<1x1xf32>
    %106 = vector.shape_cast %105 : vector<1x1xf32> to vector<1x1xf32>
    %107 = vector.broadcast %106 : vector<1x1xf32> to vector<8x128xf32>
    %c0_46 = arith.constant 0 : index
    %c0_47 = arith.constant 0 : index
    %108 = vector.load %arg12[%c0_46, %c0_47] : memref<8x128xf32, #tpu.memory_space<vmem>>, vector<8x128xf32>
    tpu.vector_store %arg12[%c0_46, %c0_47], %107 {strides = array<i32>} : memref<8x128xf32, #tpu.memory_space<vmem>>, vector<8x128xf32>,
    %cst_48 = arith.constant 0.000000e+00 : f32
    %109 = vector.broadcast %cst_48 : f32 to vector<8x128xf32>
    %c0_49 = arith.constant 0 : index
    %c0_50 = arith.constant 0 : index
    %110 = vector.load %arg13[%c0_49, %c0_50] : memref<8x128xf32, #tpu.memory_space<vmem>>, vector<8x128xf32>
    tpu.vector_store %arg13[%c0_49, %c0_50], %109 {strides = array<i32>} : memref<8x128xf32, #tpu.memory_space<vmem>>, vector<8x128xf32>,
    %cst_51 = arith.constant 0.000000e+00 : f32
    %111 = vector.broadcast %cst_51 : f32 to vector<2x126xf32>
    %112 = tpu.concatenate %74, %111 in 1 : vector<2x2xf32>, vector<2x126xf32> -> vector<2x128xf32>
    %c0_52 = arith.constant 0 : index
    %c0_53 = arith.constant 0 : index
    %113 = vector.load %arg13[%c0_52, %c0_53] : memref<8x128xf32, #tpu.memory_space<vmem>>, vector<2x128xf32>
    tpu.vector_store %arg13[%c0_52, %c0_53], %112 {strides = array<i32>} : memref<8x128xf32, #tpu.memory_space<vmem>>, vector<2x128xf32>,
    return
  }
}

</mosaic_0001>

<llo_original>
// kernel: tpu_custom_call.1
$region0: #{tpu_custom_call.1}
  #allocation0 [shape = 'u32[]', space=smem, size = 0x4, offset = 0x4, fixed_abs, tag = 'smem constant byte address 0x4 - core index']
  #allocation1 [shape = 'u32[144,128]{1,0:T(1,128)}', space=vmem, size = 0x12000, scoped, tag = 'internal scratch']
  %s0 = inlined_call_operand.vmem [shape: f32[32,160], index: 0, kind: input, shape index: {}]
  %s1 = inlined_call_operand.vmem [shape: f32[32,160], index: 1, kind: input, shape index: {}]
  %s2 = inlined_call_operand.vmem [shape: f32[32,24], index: 2, kind: input, shape index: {}]
  %s3 = inlined_call_operand.vmem [shape: f32[2,2], index: 3, kind: input, shape index: {}]
  %s4 = inlined_call_operand.vmem [shape: f32[160,24], index: 4, kind: input, shape index: {}]
  %s5 = inlined_call_operand.vmem [shape: f32[1,24], index: 5, kind: input, shape index: {}]
  %s6 = inlined_call_operand.vmem [shape: f32[24,2], index: 6, kind: input, shape index: {}]
  %s7 = inlined_call_operand.vmem [shape: f32[1,2], index: 7, kind: input, shape index: {}]
  %s8 = inlined_call_operand.vmem [shape: f32[160,24], index: 8, kind: input, shape index: {}]
  %s9 = inlined_call_operand.vmem [shape: f32[1,24], index: 9, kind: input, shape index: {}]
  %s10 = inlined_call_operand.vmem [shape: f32[24,2], index: 10, kind: input, shape index: {}]
  %s11 = inlined_call_operand.vmem [shape: f32[1,2], index: 11, kind: input, shape index: {}]
  %s12 = inlined_call_operand.hbm [shape: f32[8,128], index: 12, kind: output, shape index: {0}]
  %s13 = inlined_call_operand.hbm [shape: f32[8,128], index: 13, kind: output, shape index: {1}]
  %14 = xla_tuple %s12, %s13
  %s15 = sld [smem:[#allocation0]]
  $region66: #{tpu_custom_call.1} parent=0
    _
  %s17 = ssub.s32 1, %s15
  %s18 = scalar_select 0, %s17, %s15
  $region1: #{tpu_custom_call.1} parent=0
    #allocation2 [shape = 'u8[4096]{0}', space=vmem, size = 0x1000, scoped, tag = 'output window, operand 0, single buffered']
    #allocation3 [shape = 's32[1]{0}', space=sflag, size = 0x4, scoped, tag = 'scoped memory for tpu_custom_call.1']
    #allocation4 [shape = 'u8[4096]{0}', space=vmem, size = 0x1000, scoped, tag = 'output window, operand 1, single buffered']
    #allocation5 [shape = 's32[1]{0}', space=sflag, size = 0x4, scoped, tag = 'scoped memory for tpu_custom_call.1']
    %19 = vsyncpa [#allocation3], 0
    %20 = vsyncpa [#allocation5], 0
    // Predicated region
    $region2: #{tpu_custom_call.1} parent=1 // pred_check
      _
    $region3: #{tpu_custom_call.1} parent=1 // pred_check_branch
      %22 = sbr.rel (0) target = $region5
    $region4: #{tpu_custom_call.1} parent=1 // pred_region
      _
    $region5: #{tpu_custom_call.1} parent=1 // pred_fallthru
      _
    // Predicated region
    $region6: #{tpu_custom_call.1} parent=1 // pred_check
      _
    $region7: #{tpu_custom_call.1} parent=1 // pred_check_branch
      %24 = sbr.rel (0) target = $region9
    $region8: #{tpu_custom_call.1} parent=1 // pred_region
      _
    $region9: #{tpu_custom_call.1} parent=1 // pred_fallthru
      _
    // Predicated region
    $region10: #{tpu_custom_call.1} parent=1 // pred_check
      _
    $region11: #{tpu_custom_call.1} parent=1 // pred_check_branch
      %26 = sbr.rel (0) target = $region13
    $region12: #{tpu_custom_call.1} parent=1 // pred_region
      _
    $region13: #{tpu_custom_call.1} parent=1 // pred_fallthru
      _
    // Predicated region
    $region14: #{tpu_custom_call.1} parent=1 // pred_check
      _
    $region15: #{tpu_custom_call.1} parent=1 // pred_check_branch
      %28 = sbr.rel (0) target = $region17
    $region16: #{tpu_custom_call.1} parent=1 // pred_region
      _
    $region17: #{tpu_custom_call.1} parent=1 // pred_fallthru
      _
    // Predicated region
    $region18: #{tpu_custom_call.1} parent=1 // pred_check
      _
    $region19: #{tpu_custom_call.1} parent=1 // pred_check_branch
      %30 = sbr.rel (0) target = $region21
    $region20: #{tpu_custom_call.1} parent=1 // pred_region
      _
    $region21: #{tpu_custom_call.1} parent=1 // pred_fallthru
      _
    // Predicated region
    $region22: #{tpu_custom_call.1} parent=1 // pred_check
      _
    $region23: #{tpu_custom_call.1} parent=1 // pred_check_branch
      %32 = sbr.rel (0) target = $region25
    $region24: #{tpu_custom_call.1} parent=1 // pred_region
      _
    $region25: #{tpu_custom_call.1} parent=1 // pred_fallthru
      _
    // Predicated region
    $region26: #{tpu_custom_call.1} parent=1 // pred_check
      _
    $region27: #{tpu_custom_call.1} parent=1 // pred_check_branch
      %34 = sbr.rel (0) target = $region29
    $region28: #{tpu_custom_call.1} parent=1 // pred_region
      _
    $region29: #{tpu_custom_call.1} parent=1 // pred_fallthru
      _
    // Predicated region
    $region30: #{tpu_custom_call.1} parent=1 // pred_check
      _
    $region31: #{tpu_custom_call.1} parent=1 // pred_check_branch
      %36 = sbr.rel (0) target = $region33
    $region32: #{tpu_custom_call.1} parent=1 // pred_region
      _
    $region33: #{tpu_custom_call.1} parent=1 // pred_fallthru
      _
    // Predicated region
    $region34: #{tpu_custom_call.1} parent=1 // pred_check
      _
    $region35: #{tpu_custom_call.1} parent=1 // pred_check_branch
      %38 = sbr.rel (0) target = $region37
    $region36: #{tpu_custom_call.1} parent=1 // pred_region
      _
    $region37: #{tpu_custom_call.1} parent=1 // pred_fallthru
      _
    // Predicated region
    $region38: #{tpu_custom_call.1} parent=1 // pred_check
      _
    $region39: #{tpu_custom_call.1} parent=1 // pred_check_branch
      %40 = sbr.rel (0) target = $region41
    $region40: #{tpu_custom_call.1} parent=1 // pred_region
      _
    $region41: #{tpu_custom_call.1} parent=1 // pred_fallthru
      _
    // Predicated region
    $region42: #{tpu_custom_call.1} parent=1 // pred_check
      _
    $region43: #{tpu_custom_call.1} parent=1 // pred_check_branch
      %42 = sbr.rel (0) target = $region45
    $region44: #{tpu_custom_call.1} parent=1 // pred_region
      _
    $region45: #{tpu_custom_call.1} parent=1 // pred_fallthru
      _
    // Predicated region
    $region46: #{tpu_custom_call.1} parent=1 // pred_check
      _
    $region47: #{tpu_custom_call.1} parent=1 // pred_check_branch
      %44 = sbr.rel (0) target = $region49
    $region48: #{tpu_custom_call.1} parent=1 // pred_region
      _
    $region49: #{tpu_custom_call.1} parent=1 // pred_fallthru
      _
    %v45 = vld [vmem:[%s2] sm:$0xff]
    %v46 = vld [vmem:[%s2 + $0x8] sm:$0xff]
    %v47 = vld [vmem:[%s2 + $0x10] sm:$0xff]
    %v48 = vld [vmem:[%s2 + $0x18] sm:$0xff]
    %v49 = vld [vmem:[%s3] sm:$0x3]
    %v50 = vlaneseq
    %v51 = vshrl.u32 %v50, 7
    %v52 = vld [vmem:[%s0] sm:$0xff]
    %v53 = vld [vmem:[%s0 + $0x8] sm:$0xff]
    %v54 = vld [vmem:[%s0 + $0x10] sm:$0xff]
    %v55 = vld [vmem:[%s0 + $0x18] sm:$0xff]
    %v56 = vld [vmem:[%s0 + $0x20] sm:$0xff]
    %v57 = vld [vmem:[%s0 + $0x28] sm:$0xff]
    %v58 = vld [vmem:[%s0 + $0x30] sm:$0xff]
    %v59 = vld [vmem:[%s0 + $0x38] sm:$0xff]
    %v60 = vld [vmem:[%s4] sm:$0xff]
    %v61 = vld [vmem:[%s4 + $0x8] sm:$0xff]
    %v62 = vld [vmem:[%s4 + $0x10] sm:$0xff]
    %v63 = vld [vmem:[%s4 + $0x18] sm:$0xff]
    %v64 = vld [vmem:[%s4 + $0x20] sm:$0xff]
    %v65 = vld [vmem:[%s4 + $0x28] sm:$0xff]
    %v66 = vld [vmem:[%s4 + $0x30] sm:$0xff]
    %v67 = vld [vmem:[%s4 + $0x38] sm:$0xff]
    %v68 = vld [vmem:[%s4 + $0x40] sm:$0xff]
    %v69 = vld [vmem:[%s4 + $0x48] sm:$0xff]
    %v70 = vld [vmem:[%s4 + $0x50] sm:$0xff]
    %v71 = vld [vmem:[%s4 + $0x58] sm:$0xff]
    %v72 = vld [vmem:[%s4 + $0x60] sm:$0xff]
    %v73 = vld [vmem:[%s4 + $0x68] sm:$0xff]
    %v74 = vld [vmem:[%s4 + $0x70] sm:$0xff]
    %v75 = vld [vmem:[%s4 + $0x78] sm:$0xff]
    %v76 = vld [vmem:[%s4 + $0x80] sm:$0xff]
    %v77 = vld [vmem:[%s4 + $0x88] sm:$0xff]
    %v78 = vld [vmem:[%s4 + $0x90] sm:$0xff]
    %v79 = vld [vmem:[%s4 + $0x98] sm:$0xff]
    %v80 = vld [vmem:[%s5] sm:$0x1]
    %v81 = vld [vmem:[%s6] sm:$0xff]
    %v82 = vld [vmem:[%s6 + $0x8] sm:$0xff]
    %v83 = vld [vmem:[%s6 + $0x10] sm:$0xff]
    %v84 = vld [vmem:[%s7] sm:$0x1]
    %v86 = vlaneseq
    %v87 = vshrl.u32 %v86, 7
    %v88 = vsub.s32 0, %v87
    %v89 = vrot.slane %v80, %v88
    %vm91 = vcmask 261120
    %v93 = vsel %vm91, %v53, 0
    %v96 = vsel %vm91, %v55, 0
    %v99 = vsel %vm91, %v57, 0
    %v102 = vsel %vm91, %v59, 0
    %104 = vmatprep.subr.mxu0 0.0
    %105 = vmatpush1.msra.mxu0 %v60
    %106 = vmatprep.subr.mxu0 0.0
    %107 = vmatpush1.msra.mxu0 %v61
    %108 = vmatprep.subr.mxu0 0.0
    %109 = vmatpush1.msra.mxu0 %v62
    %110 = vmatprep.subr.mxu0 0.0
    %111 = vmatpush1.msra.mxu0 %v63
    %112 = vmatprep.subr.mxu0 0.0
    %113 = vmatpush1.msra.mxu0 %v64
    %114 = vmatprep.subr.mxu0 0.0
    %115 = vmatpush1.msra.mxu0 %v65
    %116 = vmatprep.subr.mxu0 0.0
    %117 = vmatpush1.msra.mxu0 %v66
    %118 = vmatprep.subr.mxu0 0.0
    %119 = vmatpush1.msra.mxu0 %v67
    %120 = vmatprep.subr.mxu0 0.0
    %121 = vmatpush1.msra.mxu0 %v68
    %122 = vmatprep.subr.mxu0 0.0
    %123 = vmatpush1.msra.mxu0 %v69
    %124 = vmatprep.subr.mxu0 0.0
    %125 = vmatpush1.msra.mxu0 %v70
    %126 = vmatprep.subr.mxu0 0.0
    %127 = vmatpush1.msra.mxu0 %v71
    %128 = vmatprep.subr.mxu0 0.0
    %129 = vmatpush1.msra.mxu0 %v72
    %130 = vmatprep.subr.mxu0 0.0
    %131 = vmatpush1.msra.mxu0 %v73
    %132 = vmatprep.subr.mxu0 0.0
    %133 = vmatpush1.msra.mxu0 %v74
    %134 = vmatprep.subr.mxu0 0.0
    %135 = vmatpush1.msra.mxu0 %v75
    %136 = vmatprep.subr.mxu0 0.0
    %137 = vmatpush1.msra.mxu0 %v76
    %138 = vmatprep.subr.mxu0 0.0
    %139 = vmatpush1.msra.mxu0 %v77
    %140 = vmatprep.subr.mxu0 0.0
    %141 = vmatpush1.msra.mxu0 %v78
    %142 = vmatprep.subr.mxu0 0.0
    %143 = vmatpush1.msra.mxu0 %v79
    %144 = vmatprep.subr.mxu0 0.0
    %145 = vmatpush1.msra.mxu0 0.0
    %146 = vmatprep.subr.mxu0 0.0
    %147 = vmatpush1.msra.mxu0 0.0
    %148 = vmatprep.subr.mxu0 0.0
    %149 = vmatpush1.msra.mxu0 0.0
    %150 = vmatprep.subr.mxu0 0.0
    %151 = vmatpush1.msra.mxu0 0.0
    %152 = vmatprep.subr.mxu0 0.0
    %153 = vmatpush1.msra.mxu0 0.0
    %154 = vmatprep.subr.mxu0 0.0
    %155 = vmatpush1.msra.mxu0 0.0
    %156 = vmatprep.subr.mxu0 0.0
    %157 = vmatpush1.msra.mxu0 0.0
    %158 = vmatprep.subr.mxu0 0.0
    %159 = vmatpush1.msra.mxu0 0.0
    %160 = vmatprep.subr.mxu0 0.0
    %161 = vmatpush1.msra.mxu0 0.0
    %162 = vmatprep.subr.mxu0 0.0
    %163 = vmatpush1.msra.mxu0 0.0
    %164 = vmatprep.subr.mxu0 0.0
    %165 = vmatpush1.msra.mxu0 0.0
    %166 = vmatprep.subr.mxu0 0.0
    %167 = vmatpush1.msra.mxu0 0.0
    %168 = vmatprep.mubr.f32.mxu0 %v93
    %169 = vmatmul.mubr.f32.gmra.mrb[0].mxu0 %v52
    %v170 = vpop.f32.mrb[0].mxu0
    %v171 = vadd.f32 %v89, %v170
    %v172 = vpop.f32.mrb[0].mxu0
    %173 = vmatprep.mubr.f32.mxu0 %v96
    %174 = vmatmul.mubr.f32.gmra.mrb[0].mxu0 %v54
    %v175 = vpop.f32.mrb[0].mxu0
    %v176 = vadd.f32 %v89, %v175
    %v177 = vpop.f32.mrb[0].mxu0
    %178 = vmatprep.mubr.f32.mxu0 %v99
    %179 = vmatmul.mubr.f32.gmra.mrb[0].mxu0 %v56
    %v180 = vpop.f32.mrb[0].mxu0
    %v181 = vadd.f32 %v89, %v180
    %v182 = vpop.f32.mrb[0].mxu0
    %183 = vmatprep.mubr.f32.mxu0 %v102
    %184 = vmatmul.mubr.f32.gmra.mrb[0].mxu0 %v58
    %v185 = vpop.f32.mrb[0].mxu0
    %v186 = vadd.f32 %v89, %v185
    %v187 = vpop.f32.mrb[0].mxu0
    %188 = vdwg.mxu0
    %v189 = vmax.f32 %v171, 0.0
    %v190 = vmax.f32 %v176, 0.0
    %v191 = vmax.f32 %v181, 0.0
    %v192 = vmax.f32 %v186, 0.0
    %v193 = vmul.f32 %v189, %v45
    %v194 = vmul.f32 %v190, %v46
    %v195 = vmul.f32 %v191, %v47
    %v196 = vmul.f32 %v192, %v48
    %vm197 = vcmask 195584
    %v198 = vsel %vm197, %v193, -inf
    %v199 = vsel %vm197, %v194, -inf
    %v200 = vmax.f32 %v198, %v199
    %v201 = vrot.slane %v200, 4
    %v202 = vmax.f32 %v200, %v201
    %v203 = vrot.slane %v202, 2
    %v204 = vmax.f32 %v202, %v203
    %v205 = vrot.slane %v204, 1
    %v206 = vmax.f32 %v204, %v205
    %vm207 = vcmp.eq.s32.totalorder %v51, 0
    %v208 = vsel %vm207, %v206, 0.0
    %v209 = vsel %vm197, %v195, -inf
    %v210 = vsel %vm197, %v196, -inf
    %v211 = vmax.f32 %v209, %v210
    %v212 = vrot.slane %v211, 4
    %v213 = vmax.f32 %v211, %v212
    %v214 = vrot.slane %v213, 2
    %v215 = vmax.f32 %v213, %v214
    %v216 = vrot.slane %v215, 1
    %v217 = vmax.f32 %v215, %v216
    %vm218 = vcmp.eq.s32.totalorder %v51, 1
    %v219 = vsel %vm218, %v217, %v208
    %v221 = vlaneseq
    %v222 = vshrl.u32 %v221, 7
    %v223 = vsub.s32 0, %v222
    %v224 = vrot.slane %v84, %v223
    %v227 = vsel %vm197, %v219, 0
    %229 = vmatprep.subr.mxu0 0.0
    %230 = vmatpush1.msra.mxu0 %v81
    %231 = vmatprep.subr.mxu0 0.0
    %232 = vmatpush1.msra.mxu0 %v82
    %233 = vmatprep.subr.mxu0 0.0
    %234 = vmatpush1.msra.mxu0 %v83
    %235 = vmatprep.subr.mxu0 0.0
    %236 = vmatpush1.msra.mxu0 0.0
    %237 = vmatprep.subr.mxu0 0.0
    %238 = vmatpush1.msra.mxu0 0.0
    %239 = vmatprep.subr.mxu0 0.0
    %240 = vmatpush1.msra.mxu0 0.0
    %241 = vmatprep.subr.mxu0 0.0
    %242 = vmatpush1.msra.mxu0 0.0
    %243 = vmatprep.subr.mxu0 0.0
    %244 = vmatpush1.msra.mxu0 0.0
    %245 = vmatprep.subr.mxu0 0.0
    %246 = vmatpush1.msra.mxu0 0.0
    %247 = vmatprep.subr.mxu0 0.0
    %248 = vmatpush1.msra.mxu0 0.0
    %249 = vmatprep.subr.mxu0 0.0
    %250 = vmatpush1.msra.mxu0 0.0
    %251 = vmatprep.subr.mxu0 0.0
    %252 = vmatpush1.msra.mxu0 0.0
    %253 = vmatprep.subr.mxu0 0.0
    %254 = vmatpush1.msra.mxu0 0.0
    %255 = vmatprep.subr.mxu0 0.0
    %256 = vmatpush1.msra.mxu0 0.0
    %257 = vmatprep.subr.mxu0 0.0
    %258 = vmatpush1.msra.mxu0 0.0
    %259 = vmatprep.subr.mxu0 0.0
    %260 = vmatpush1.msra.mxu0 0.0
    %261 = vmatprep.subr.mxu0 0.0
    %262 = vmatpush1.msra.mxu0 0.0
    %263 = vmatprep.subr.mxu0 0.0
    %264 = vmatpush1.msra.mxu0 0.0
    %265 = vmatprep.subr.mxu0 0.0
    %266 = vmatpush1.msra.mxu0 0.0
    %267 = vmatprep.subr.mxu0 0.0
    %268 = vmatpush1.msra.mxu0 0.0
    %269 = vmatprep.subr.mxu0 0.0
    %270 = vmatpush1.msra.mxu0 0.0
    %271 = vmatprep.subr.mxu0 0.0
    %272 = vmatpush1.msra.mxu0 0.0
    %273 = vmatprep.subr.mxu0 0.0
    %274 = vmatpush1.msra.mxu0 0.0
    %275 = vmatprep.subr.mxu0 0.0
    %276 = vmatpush1.msra.mxu0 0.0
    %277 = vmatprep.subr.mxu0 0.0
    %278 = vmatpush1.msra.mxu0 0.0
    %279 = vmatprep.subr.mxu0 0.0
    %280 = vmatpush1.msra.mxu0 0.0
    %281 = vmatprep.subr.mxu0 0.0
    %282 = vmatpush1.msra.mxu0 0.0
    %283 = vmatprep.subr.mxu0 0.0
    %284 = vmatpush1.msra.mxu0 0.0
    %285 = vmatprep.subr.mxu0 0.0
    %286 = vmatpush1.msra.mxu0 0.0
    %287 = vmatprep.subr.mxu0 0.0
    %288 = vmatpush1.msra.mxu0 0.0
    %289 = vmatprep.subr.mxu0 0.0
    %290 = vmatpush1.msra.mxu0 0.0
    %291 = vmatprep.subr.mxu0 0.0
    %292 = vmatpush1.msra.mxu0 0.0
    %293 = vmatprep.mubr.f32.mxu0 0.0
    %294 = vmatmul.mubr.f32.gmra.mrb[0].mxu0 %v227
    %v295 = vpop.f32.mrb[0].mxu0
    %v296 = vadd.f32 %v224, %v295
    %v297 = vpop.f32.mrb[0].mxu0
    %298 = vdwg.mxu0
    %v299 = vld [vmem:[%s1] sm:$0xff]
    %v300 = vld [vmem:[%s1 + $0x8] sm:$0xff]
    %v301 = vld [vmem:[%s1 + $0x10] sm:$0xff]
    %v302 = vld [vmem:[%s1 + $0x18] sm:$0xff]
    %v303 = vld [vmem:[%s1 + $0x20] sm:$0xff]
    %v304 = vld [vmem:[%s1 + $0x28] sm:$0xff]
    %v305 = vld [vmem:[%s1 + $0x30] sm:$0xff]
    %v306 = vld [vmem:[%s1 + $0x38] sm:$0xff]
    %v307 = vld [vmem:[%s8] sm:$0xff]
    %v308 = vld [vmem:[%s8 + $0x8] sm:$0xff]
    %v309 = vld [vmem:[%s8 + $0x10] sm:$0xff]
    %v310 = vld [vmem:[%s8 + $0x18] sm:$0xff]
    %v311 = vld [vmem:[%s8 + $0x20] sm:$0xff]
    %v312 = vld [vmem:[%s8 + $0x28] sm:$0xff]
    %v313 = vld [vmem:[%s8 + $0x30] sm:$0xff]
    %v314 = vld [vmem:[%s8 + $0x38] sm:$0xff]
    %v315 = vld [vmem:[%s8 + $0x40] sm:$0xff]
    %v316 = vld [vmem:[%s8 + $0x48] sm:$0xff]
    %v317 = vld [vmem:[%s8 + $0x50] sm:$0xff]
    %v318 = vld [vmem:[%s8 + $0x58] sm:$0xff]
    %v319 = vld [vmem:[%s8 + $0x60] sm:$0xff]
    %v320 = vld [vmem:[%s8 + $0x68] sm:$0xff]
    %v321 = vld [vmem:[%s8 + $0x70] sm:$0xff]
    %v322 = vld [vmem:[%s8 + $0x78] sm:$0xff]
    %v323 = vld [vmem:[%s8 + $0x80] sm:$0xff]
    %v324 = vld [vmem:[%s8 + $0x88] sm:$0xff]
    %v325 = vld [vmem:[%s8 + $0x90] sm:$0xff]
    %v326 = vld [vmem:[%s8 + $0x98] sm:$0xff]
    %v327 = vld [vmem:[%s9] sm:$0x1]
    %v328 = vld [vmem:[%s10] sm:$0xff]
    %v329 = vld [vmem:[%s10 + $0x8] sm:$0xff]
    %v330 = vld [vmem:[%s10 + $0x10] sm:$0xff]
    %v331 = vld [vmem:[%s11] sm:$0x1]
    %v333 = vlaneseq
    %v334 = vshrl.u32 %v333, 7
    %v335 = vsub.s32 0, %v334
    %v336 = vrot.slane %v327, %v335
    %v339 = vsel %vm91, %v300, 0
    %v342 = vsel %vm91, %v302, 0
    %v345 = vsel %vm91, %v304, 0
    %v348 = vsel %vm91, %v306, 0
    %350 = vmatprep.subr.mxu0 0.0
    %351 = vmatpush1.msra.mxu0 %v307
    %352 = vmatprep.subr.mxu0 0.0
    %353 = vmatpush1.msra.mxu0 %v308
    %354 = vmatprep.subr.mxu0 0.0
    %355 = vmatpush1.msra.mxu0 %v309
    %356 = vmatprep.subr.mxu0 0.0
    %357 = vmatpush1.msra.mxu0 %v310
    %358 = vmatprep.subr.mxu0 0.0
    %359 = vmatpush1.msra.mxu0 %v311
    %360 = vmatprep.subr.mxu0 0.0
    %361 = vmatpush1.msra.mxu0 %v312
    %362 = vmatprep.subr.mxu0 0.0
    %363 = vmatpush1.msra.mxu0 %v313
    %364 = vmatprep.subr.mxu0 0.0
    %365 = vmatpush1.msra.mxu0 %v314
    %366 = vmatprep.subr.mxu0 0.0
    %367 = vmatpush1.msra.mxu0 %v315
    %368 = vmatprep.subr.mxu0 0.0
    %369 = vmatpush1.msra.mxu0 %v316
    %370 = vmatprep.subr.mxu0 0.0
    %371 = vmatpush1.msra.mxu0 %v317
    %372 = vmatprep.subr.mxu0 0.0
    %373 = vmatpush1.msra.mxu0 %v318
    %374 = vmatprep.subr.mxu0 0.0
    %375 = vmatpush1.msra.mxu0 %v319
    %376 = vmatprep.subr.mxu0 0.0
    %377 = vmatpush1.msra.mxu0 %v320
    %378 = vmatprep.subr.mxu0 0.0
    %379 = vmatpush1.msra.mxu0 %v321
    %380 = vmatprep.subr.mxu0 0.0
    %381 = vmatpush1.msra.mxu0 %v322
    %382 = vmatprep.subr.mxu0 0.0
    %383 = vmatpush1.msra.mxu0 %v323
    %384 = vmatprep.subr.mxu0 0.0
    %385 = vmatpush1.msra.mxu0 %v324
    %386 = vmatprep.subr.mxu0 0.0
    %387 = vmatpush1.msra.mxu0 %v325
    %388 = vmatprep.subr.mxu0 0.0
    %389 = vmatpush1.msra.mxu0 %v326
    %390 = vmatprep.subr.mxu0 0.0
    %391 = vmatpush1.msra.mxu0 0.0
    %392 = vmatprep.subr.mxu0 0.0
    %393 = vmatpush1.msra.mxu0 0.0
    %394 = vmatprep.subr.mxu0 0.0
    %395 = vmatpush1.msra.mxu0 0.0
    %396 = vmatprep.subr.mxu0 0.0
    %397 = vmatpush1.msra.mxu0 0.0
    %398 = vmatprep.subr.mxu0 0.0
    %399 = vmatpush1.msra.mxu0 0.0
    %400 = vmatprep.subr.mxu0 0.0
    %401 = vmatpush1.msra.mxu0 0.0
    %402 = vmatprep.subr.mxu0 0.0
    %403 = vmatpush1.msra.mxu0 0.0
    %404 = vmatprep.subr.mxu0 0.0
    %405 = vmatpush1.msra.mxu0 0.0
    %406 = vmatprep.subr.mxu0 0.0
    %407 = vmatpush1.msra.mxu0 0.0
    %408 = vmatprep.subr.mxu0 0.0
    %409 = vmatpush1.msra.mxu0 0.0
    %410 = vmatprep.subr.mxu0 0.0
    %411 = vmatpush1.msra.mxu0 0.0
    %412 = vmatprep.subr.mxu0 0.0
    %413 = vmatpush1.msra.mxu0 0.0
    %414 = vmatprep.mubr.f32.mxu0 %v339
    %415 = vmatmul.mubr.f32.gmra.mrb[0].mxu0 %v299
    %v416 = vpop.f32.mrb[0].mxu0
    %v417 = vadd.f32 %v336, %v416
    %v418 = vpop.f32.mrb[0].mxu0
    %419 = vmatprep.mubr.f32.mxu0 %v342
    %420 = vmatmul.mubr.f32.gmra.mrb[0].mxu0 %v301
    %v421 = vpop.f32.mrb[0].mxu0
    %v422 = vadd.f32 %v336, %v421
    %v423 = vpop.f32.mrb[0].mxu0
    %424 = vmatprep.mubr.f32.mxu0 %v345
    %425 = vmatmul.mubr.f32.gmra.mrb[0].mxu0 %v303
    %v426 = vpop.f32.mrb[0].mxu0
    %v427 = vadd.f32 %v336, %v426
    %v428 = vpop.f32.mrb[0].mxu0
    %429 = vmatprep.mubr.f32.mxu0 %v348
    %430 = vmatmul.mubr.f32.gmra.mrb[0].mxu0 %v305
    %v431 = vpop.f32.mrb[0].mxu0
    %v432 = vadd.f32 %v336, %v431
    %v433 = vpop.f32.mrb[0].mxu0
    %434 = vdwg.mxu0
    %v435 = vmax.f32 %v417, 0.0
    %v436 = vmax.f32 %v422, 0.0
    %v437 = vmax.f32 %v427, 0.0
    %v438 = vmax.f32 %v432, 0.0
    %v439 = vmul.f32 %v435, %v45
    %v440 = vmul.f32 %v436, %v46
    %v441 = vmul.f32 %v437, %v47
    %v442 = vmul.f32 %v438, %v48
    %v443 = vsel %vm197, %v439, -inf
    %v444 = vsel %vm197, %v440, -inf
    %v445 = vmax.f32 %v443, %v444
    %v446 = vrot.slane %v445, 4
    %v447 = vmax.f32 %v445, %v446
    %v448 = vrot.slane %v447, 2
    %v449 = vmax.f32 %v447, %v448
    %v450 = vrot.slane %v449, 1
    %v451 = vmax.f32 %v449, %v450
    %v452 = vsel %vm207, %v451, 0.0
    %v453 = vsel %vm197, %v441, -inf
    %v454 = vsel %vm197, %v442, -inf
    %v455 = vmax.f32 %v453, %v454
    %v456 = vrot.slane %v455, 4
    %v457 = vmax.f32 %v455, %v456
    %v458 = vrot.slane %v457, 2
    %v459 = vmax.f32 %v457, %v458
    %v460 = vrot.slane %v459, 1
    %v461 = vmax.f32 %v459, %v460
    %v462 = vsel %vm218, %v461, %v452
    %v464 = vlaneseq
    %v465 = vshrl.u32 %v464, 7
    %v466 = vsub.s32 0, %v465
    %v467 = vrot.slane %v331, %v466
    %v470 = vsel %vm197, %v462, 0
    %472 = vmatprep.subr.mxu0 0.0
    %473 = vmatpush1.msra.mxu0 %v328
    %474 = vmatprep.subr.mxu0 0.0
    %475 = vmatpush1.msra.mxu0 %v329
    %476 = vmatprep.subr.mxu0 0.0
    %477 = vmatpush1.msra.mxu0 %v330
    %478 = vmatprep.subr.mxu0 0.0
    %479 = vmatpush1.msra.mxu0 0.0
    %480 = vmatprep.subr.mxu0 0.0
    %481 = vmatpush1.msra.mxu0 0.0
    %482 = vmatprep.subr.mxu0 0.0
    %483 = vmatpush1.msra.mxu0 0.0
    %484 = vmatprep.subr.mxu0 0.0
    %485 = vmatpush1.msra.mxu0 0.0
    %486 = vmatprep.subr.mxu0 0.0
    %487 = vmatpush1.msra.mxu0 0.0
    %488 = vmatprep.subr.mxu0 0.0
    %489 = vmatpush1.msra.mxu0 0.0
    %490 = vmatprep.subr.mxu0 0.0
    %491 = vmatpush1.msra.mxu0 0.0
    %492 = vmatprep.subr.mxu0 0.0
    %493 = vmatpush1.msra.mxu0 0.0
    %494 = vmatprep.subr.mxu0 0.0
    %495 = vmatpush1.msra.mxu0 0.0
    %496 = vmatprep.subr.mxu0 0.0
    %497 = vmatpush1.msra.mxu0 0.0
    %498 = vmatprep.subr.mxu0 0.0
    %499 = vmatpush1.msra.mxu0 0.0
    %500 = vmatprep.subr.mxu0 0.0
    %501 = vmatpush1.msra.mxu0 0.0
    %502 = vmatprep.subr.mxu0 0.0
    %503 = vmatpush1.msra.mxu0 0.0
    %504 = vmatprep.subr.mxu0 0.0
    %505 = vmatpush1.msra.mxu0 0.0
    %506 = vmatprep.subr.mxu0 0.0
    %507 = vmatpush1.msra.mxu0 0.0
    %508 = vmatprep.subr.mxu0 0.0
    %509 = vmatpush1.msra.mxu0 0.0
    %510 = vmatprep.subr.mxu0 0.0
    %511 = vmatpush1.msra.mxu0 0.0
    %512 = vmatprep.subr.mxu0 0.0
    %513 = vmatpush1.msra.mxu0 0.0
    %514 = vmatprep.subr.mxu0 0.0
    %515 = vmatpush1.msra.mxu0 0.0
    %516 = vmatprep.subr.mxu0 0.0
    %517 = vmatpush1.msra.mxu0 0.0
    %518 = vmatprep.subr.mxu0 0.0
    %519 = vmatpush1.msra.mxu0 0.0
    %520 = vmatprep.subr.mxu0 0.0
    %521 = vmatpush1.msra.mxu0 0.0
    %522 = vmatprep.subr.mxu0 0.0
    %523 = vmatpush1.msra.mxu0 0.0
    %524 = vmatprep.subr.mxu0 0.0
    %525 = vmatpush1.msra.mxu0 0.0
    %526 = vmatprep.subr.mxu0 0.0
    %527 = vmatpush1.msra.mxu0 0.0
    %528 = vmatprep.subr.mxu0 0.0
    %529 = vmatpush1.msra.mxu0 0.0
    %530 = vmatprep.subr.mxu0 0.0
    %531 = vmatpush1.msra.mxu0 0.0
    %532 = vmatprep.subr.mxu0 0.0
    %533 = vmatpush1.msra.mxu0 0.0
    %534 = vmatprep.subr.mxu0 0.0
    %535 = vmatpush1.msra.mxu0 0.0
    %536 = vmatprep.mubr.f32.mxu0 0.0
    %537 = vmatmul.mubr.f32.gmra.mrb[0].mxu0 %v470
    %v538 = vpop.f32.mrb[0].mxu0
    %v539 = vadd.f32 %v467, %v538
    %v540 = vpop.f32.mrb[0].mxu0
    %541 = vdwg.mxu0
    %vm542 = vcmask 9216
    %v543 = vsel %vm542, %v296, -inf
    %544 = vmax.xlane.f32.xlu0 %v543
    %v545 = vpop.xlane.xlu0 %544
    %v546 = vsub.f32 %v296, %v545
    %v547 = vmul.f32 %v546, 1.442695
    %v548 = vpow.pop %v547
    %v549 = vsel %vm542, %v548, 0.0
    %550 = vadd.xlane.f32.xlu0 %v549
    %v551 = vpop.xlane.xlu0 %550
    %v552 = vrcp.pop %v551
    %v553 = vmul.f32 %v548, %v552
    %v554 = vlog2.pop %v551
    %v555 = vmul.f32 %v554, 0.6931472
    %v556 = vadd.f32 %v555, %v545
    %v557 = vmul.f32 %v49, %v296
    %v558 = vsel %vm542, %v557, 0.0
    %559 = vadd.xlane.f32.xlu0 %v558
    %v560 = vpop.xlane.xlu0 %559
    %v561 = vsub.f32 %v556, %v560
    %v562 = vsel %vm542, %v539, -inf
    %563 = vmax.xlane.f32.xlu0 %v562
    %v564 = vpop.xlane.xlu0 %563
    %v565 = vsub.f32 %v539, %v564
    %v566 = vmul.f32 %v565, 1.442695
    %v567 = vpow.pop %v566
    %v568 = vsel %vm542, %v567, 0.0
    %569 = vadd.xlane.f32.xlu0 %v568
    %v570 = vpop.xlane.xlu0 %569
    %v571 = vlog2.pop %v570
    %v572 = vmul.f32 %v571, 0.6931472
    %v573 = vadd.f32 %v572, %v564
    %v574 = vmul.f32 %v49, %v539
    %v575 = vsel %vm542, %v574, 0.0
    %576 = vadd.xlane.f32.xlu0 %v575
    %v577 = vpop.xlane.xlu0 %576
    %v578 = vsub.f32 %v573, %v577
    %v579 = vadd.f32 %v561, %v578
    %vm580 = vcmask 1041408
    %v581 = vsel %vm580, %v579, 0.0
    %v582 = vrot.slane %v581, 4
    %v583 = vadd.f32 %v581, %v582
    %v584 = vrot.slane %v583, 2
    %v585 = vadd.f32 %v583, %v584
    %v586 = vrot.slane %v585, 1
    %v587 = vadd.f32 %v585, %v586
    %v588 = vrcp.pop 2.0
    %v589 = vmul.f32 %v587, %v588
    %590 = vst [vmem:[#allocation2] sm:$0xff] %v589
    %591 = vst [vmem:[#allocation4] sm:$0xff] 0.0
    %vm592 = vcmask 15360
    %v593 = vsel %vm592, %v553, 0.0
    %594 = vst [vmem:[#allocation4] sm:$0x3] %v593
    // Predicated region
    $region50: #{tpu_custom_call.1} parent=1 // pred_check
      _
    $region51: #{tpu_custom_call.1} parent=1 // pred_check_branch
      %596 = sbr.rel (0) target = $region53
    $region52: #{tpu_custom_call.1} parent=1 // pred_region
      %s598 = ssub.s32 128, 128
      %599 = vsyncadd [#allocation3], %s598
      %s601 = sshll.u32 [#allocation2], 4
      %s602 = int_to_ptr.vmem [resolvable:$true] %s601
      %604 = dma.vmem_to_hbm [thread:$0]  %s602, 128, %s12, [#allocation3]
    $region53: #{tpu_custom_call.1} parent=1 // pred_fallthru
      _
    // Predicated region
    $region54: #{tpu_custom_call.1} parent=1 // pred_check
      _
    $region55: #{tpu_custom_call.1} parent=1 // pred_check_branch
      %606 = sbr.rel (0) target = $region57
    $region56: #{tpu_custom_call.1} parent=1 // pred_region
      %s608 = ssub.s32 128, 128
      %609 = vsyncadd [#allocation5], %s608
      %s611 = sshll.u32 [#allocation4], 4
      %s612 = int_to_ptr.vmem [resolvable:$true] %s611
      %614 = dma.vmem_to_hbm [thread:$0]  %s612, 128, %s13, [#allocation5]
    $region57: #{tpu_custom_call.1} parent=1 // pred_fallthru
      _
    // Predicated region
    $region58: #{tpu_custom_call.1} parent=1 // pred_check
      _
    $region59: #{tpu_custom_call.1} parent=1 // pred_check_branch
      %616 = sbr.rel (0) target = $region61
    $region60: #{tpu_custom_call.1} parent=1 // pred_region
      %617 = dma.done [#allocation3], 128
    $region61: #{tpu_custom_call.1} parent=1 // pred_fallthru
      _
    // Predicated region
    $region62: #{tpu_custom_call.1} parent=1 // pred_check
      _
    $region63: #{tpu_custom_call.1} parent=1 // pred_check_branch
      %619 = sbr.rel (0) target = $region65
    $region64: #{tpu_custom_call.1} parent=1 // pred_region
      %620 = dma.done [#allocation5], 128
    $region65: #{tpu_custom_call.1} parent=1 // pred_fallthru
      _
    %621 = vsyncpa [#allocation3], 1
    %622 = vsyncpa [#allocation5], 1

</llo_original>
